<compile_context>
chip_gen: v5e
topology: v5e:2x2
jax: 0.10.0
libtpu: 0.0.40
codegen_flags: <defaults>
</compile_context>

<pallas_src>
import functools

import jax
import jax.numpy as jnp
from jax import lax
from jax.experimental import pallas as pl
from jax.experimental.pallas import tpu as pltpu

LANES = 128        # vreg lane dim
SUB = 8            # vreg sublane dim
TARGET_BM = 4096   # rows per block: 4096*128*4B = 2 MiB f32 per input block


def _num_tensorcores():
    # Two TensorCores per chip only on v7x-class parts; v5e/v6e are single-TC,
    # where a 2-way outer split only adds wasted (fully masked) duplicate work.
    try:
        kind = jax.devices()[0].device_kind.lower()
    except Exception:
        return 1
    return 2 if "v7" in kind else 1


def _charbonnier_kernel(x_ref, y_ref, o_ref, *, eps2, bm, bpc, rows, needs_mask):
    c = pl.program_id(0)   # core-split axis ("parallel")
    i = pl.program_id(1)   # streaming / reduction axis ("arbitrary")

    @pl.when(i == 0)
    def _():
        o_ref[...] = jnp.zeros_like(o_ref)

    d = x_ref[...].astype(jnp.float32) - y_ref[...].astype(jnp.float32)
    v = jnp.sqrt(d * d + jnp.float32(eps2))

    def accum(val):
        if bm % SUB == 0:
            # (bm,128) -> (bm/8, 8, 128): each (8,128) group is exactly one
            # vreg, so the tree-sum is pure VPU (no XLU) and the per-core
            # accumulator is a single 4 KiB vreg tile.
            o_ref[...] += val.reshape(bm // SUB, SUB, LANES).sum(axis=0)
        else:
            # Tiny-input fallback (rows < 8): one cross-sublane reduce into
            # row 0 of the (8,128) accumulator; the other rows stay zero.
            o_ref[0:1, :] = o_ref[0:1, :] + jnp.sum(val, axis=0, keepdims=True)

    if needs_mask:
        # Predicated: only the block(s) touching/over-running the data edge
        # pay for the iota/compare/select; the hot path has no mask ops.
        blk = c * bpc + i                    # logical (unclamped) block id
        needs = (blk + 1) * bm > rows

        @pl.when(needs)
        def _():
            row0 = blk * bm
            rid = lax.broadcasted_iota(jnp.int32, (bm, LANES), 0)
            mask = (row0 + rid) < rows       # valid global rows only
            accum(jnp.where(mask, v, jnp.float32(0.0)))

        @pl.when(jnp.logical_not(needs))
        def _():
            accum(v)
    else:
        accum(v)


def charbonnier_loss(x, y, eps=1e-3):
    """Equivalent of CharbonnierLoss().forward(x, y): scalar f32 mean."""
    assert x.shape == y.shape
    n = int(x.size)
    assert n > 0
    eps2 = float(eps) * float(eps)

    xf = x.reshape(-1)
    yf = y.reshape(-1)

    rows = n // LANES                        # full 128-lane rows for the kernel
    rem = n % LANES                          # sub-128 remainder (tiny, JAX path)

    total = jnp.float32(0.0)

    if rows > 0:
        if rem:
            # No whole-tensor jnp.pad: only feed the multiple-of-128 prefix.
            xm = xf[: rows * LANES]
            ym = yf[: rows * LANES]
        else:
            xm, ym = xf, yf
        x2 = xm.reshape(rows, LANES)
        y2 = ym.reshape(rows, LANES)

        if rows >= SUB:
            bm = min(TARGET_BM, (rows // SUB) * SUB)   # multiple of 8 sublanes
        else:
            bm = rows                                   # tiny input: full dim

        nb = pl.cdiv(rows, bm)                          # blocks covering the data
        ncores = max(1, min(_num_tensorcores(), nb))    # never over-split
        bpc = pl.cdiv(nb, ncores)                       # blocks per core
        needs_mask = (ncores * bpc * bm) != rows

        kernel = functools.partial(
            _charbonnier_kernel,
            eps2=eps2, bm=bm, bpc=bpc, rows=rows, needs_mask=needs_mask)

        def in_map(c, i):
            # Clamp so over-coverage blocks re-read the last valid block; their
            # contribution is zeroed in-kernel by the predicated mask.
            return (jnp.minimum(c * bpc + i, nb - 1), 0)

        partials = pl.pallas_call(
            kernel,
            out_shape=jax.ShapeDtypeStruct((ncores * SUB, LANES), jnp.float32),
            grid_spec=pltpu.PrefetchScalarGridSpec(
                num_scalar_prefetch=0,
                grid=(ncores, bpc),
                in_specs=[
                    pl.BlockSpec((bm, LANES), in_map),
                    pl.BlockSpec((bm, LANES), in_map),
                ],
                out_specs=pl.BlockSpec((SUB, LANES), lambda c, i: (c, 0)),
            ),
            compiler_params=pltpu.CompilerParams(
                dimension_semantics=("parallel", "arbitrary"),
                vmem_limit_bytes=32 * 1024 * 1024,
            ),
            cost_estimate=pl.CostEstimate(
                flops=4 * rows * LANES,
                transcendentals=rows * LANES,
                bytes_accessed=2 * rows * LANES * x.dtype.itemsize,
            ),
        )(x2, y2)

        # Single cross-lane/sublane reduction, once, on an 8x128-per-core slab.
        total = total + jnp.sum(partials)

    if rem:
        # < 128 elements: negligible plain-JAX tail, avoids any pad/copy path.
        xt = xf[rows * LANES:].astype(jnp.float32)
        yt = yf[rows * LANES:].astype(jnp.float32)
        dt = xt - yt
        total = total + jnp.sum(jnp.sqrt(dt * dt + jnp.float32(eps2)))

    return total / jnp.float32(n)


if __name__ == "__main__":
    key = jax.random.PRNGKey(0)
    kx, ky = jax.random.split(key)
    x = jax.random.normal(kx, (2, 4, 16, 16), dtype=jnp.float32)  # NCHW
    y = jax.random.normal(ky, (2, 4, 16, 16), dtype=jnp.float32)  # NCHW

    loss = jax.block_until_ready(charbonnier_loss(x, y))

    # Reference check in plain JAX.
    eps = 1e-3
    d = x - y
    ref = jnp.mean(jnp.sqrt(d * d + eps * eps))
    assert jnp.allclose(loss, ref, rtol=1e-5, atol=1e-6), (loss, ref)

    print("KERNEL_OK")
</pallas_src>

<mosaic_0001>
module attributes {stable_mosaic.version = 11 : i64} {
  func.func @_charbonnier_kernel(%arg0: i32, %arg1: i32, %arg2: memref<16x128xf32, #tpu.memory_space<vmem>>, %arg3: memref<16x128xf32, #tpu.memory_space<vmem>>, %arg4: memref<8x128xf32, #tpu.memory_space<vmem>>) attributes {dimension_semantics = [#tpu.dimension_semantics<parallel>, #tpu.dimension_semantics<arbitrary>], iteration_bounds = array<i64: 1, 1>, scalar_prefetch = 0 : i64, scratch_operands = 0 : i64, tpu.core_type = #tpu.core_type<tc>, window_params = [{transform_indices = @transform_0, window_bounds = array<i64: 16, 128>}, {transform_indices = @transform_1, window_bounds = array<i64: 16, 128>}, {transform_indices = @transform_2, window_bounds = array<i64: 8, 128>}]} {
    %c0_i32 = arith.constant 0 : i32
    %0 = arith.cmpi eq, %arg1, %c0_i32 : i32
    %1 = arith.extui %0 : i1 to i32
    %c0_i32_0 = arith.constant 0 : i32
    %2 = arith.cmpi ne, %1, %c0_i32_0 : i32
    scf.if %2 {
      %cst_9 = arith.constant 0.000000e+00 : f32
      %15 = vector.broadcast %cst_9 : f32 to vector<8x128xf32>
      %c0_10 = arith.constant 0 : index
      %c0_11 = arith.constant 0 : index
      %16 = vector.load %arg4[%c0_10, %c0_11] : memref<8x128xf32, #tpu.memory_space<vmem>>, vector<8x128xf32>
      tpu.vector_store %arg4[%c0_10, %c0_11], %15 {strides = array<i32>} : memref<8x128xf32, #tpu.memory_space<vmem>>, vector<8x128xf32>,
    } else {
    }
    %c0 = arith.constant 0 : index
    %c0_1 = arith.constant 0 : index
    %3 = vector.load %arg2[%c0, %c0_1] : memref<16x128xf32, #tpu.memory_space<vmem>>, vector<16x128xf32>
    %c0_2 = arith.constant 0 : index
    %c0_3 = arith.constant 0 : index
    %4 = vector.load %arg3[%c0_2, %c0_3] : memref<16x128xf32, #tpu.memory_space<vmem>>, vector<16x128xf32>
    %5 = arith.subf %3, %4 : vector<16x128xf32>
    %6 = arith.mulf %5, %5 : vector<16x128xf32>
    %cst = arith.constant 9.99999997E-7 : f32
    %7 = vector.broadcast %cst : f32 to vector<16x128xf32>
    %8 = arith.addf %6, %7 : vector<16x128xf32>
    %9 = math.sqrt %8 : vector<16x128xf32>
    %c0_4 = arith.constant 0 : index
    %c0_5 = arith.constant 0 : index
    %10 = vector.load %arg4[%c0_4, %c0_5] : memref<8x128xf32, #tpu.memory_space<vmem>>, vector<8x128xf32>
    %11 = vector.shape_cast %9 : vector<16x128xf32> to vector<2x8x128xf32>
    %cst_6 = arith.constant dense<0.000000e+00> : vector<8x128xf32>
    %12 = vector.multi_reduction <add>, %11, %cst_6 [0] : vector<2x8x128xf32> to vector<8x128xf32>
    %13 = arith.addf %10, %12 : vector<8x128xf32>
    %c0_7 = arith.constant 0 : index
    %c0_8 = arith.constant 0 : index
    %14 = vector.load %arg4[%c0_7, %c0_8] : memref<8x128xf32, #tpu.memory_space<vmem>>, vector<8x128xf32>
    tpu.vector_store %arg4[%c0_7, %c0_8], %13 {strides = array<i32>} : memref<8x128xf32, #tpu.memory_space<vmem>>, vector<8x128xf32>,
    return
  }
  func.func @transform_0(%arg0: i32, %arg1: i32) -> (i32, i32) {
    %c1_i32 = arith.constant 1 : i32
    %0 = arith.muli %arg0, %c1_i32 : i32
    %1 = arith.addi %0, %arg1 : i32
    %c0_i32 = arith.constant 0 : i32
    %2 = arith.minsi %1, %c0_i32 : i32
    %c0_i32_0 = arith.constant 0 : i32
    %c0_i32_1 = arith.constant 0 : i32
    return %2, %c0_i32_0 : i32, i32
  }
  func.func @transform_1(%arg0: i32, %arg1: i32) -> (i32, i32) {
    %c1_i32 = arith.constant 1 : i32
    %0 = arith.muli %arg0, %c1_i32 : i32
    %1 = arith.addi %0, %arg1 : i32
    %c0_i32 = arith.constant 0 : i32
    %2 = arith.minsi %1, %c0_i32 : i32
    %c0_i32_0 = arith.constant 0 : i32
    %c0_i32_1 = arith.constant 0 : i32
    return %2, %c0_i32_0 : i32, i32
  }
  func.func @transform_2(%arg0: i32, %arg1: i32) -> (i32, i32) {
    %c0_i32 = arith.constant 0 : i32
    %c0_i32_0 = arith.constant 0 : i32
    return %arg0, %c0_i32 : i32, i32
  }
}

</mosaic_0001>

<llo_original>
// kernel: tpu_custom_call.1
$region0: #{tpu_custom_call.1}
  #allocation0 [shape = 'u32[]', space=smem, size = 0x4, offset = 0x4, fixed_abs, tag = 'smem constant byte address 0x4 - core index']
  #allocation1 [shape = 'u32[72,128]{1,0:T(1,128)}', space=vmem, size = 0x9000, scoped, tag = 'internal scratch']
  %s0 = inlined_call_operand.hbm [shape: f32[16,128], index: 0, kind: input, shape index: {}]
  %s1 = inlined_call_operand.hbm [shape: f32[16,128], index: 1, kind: input, shape index: {}]
  %s2 = inlined_call_operand.hbm [shape: f32[8,128], index: 2, kind: output, shape index: {}]
  %s3 = sld [smem:[#allocation0]]
  $region30: #{tpu_custom_call.1} parent=0
    _
  %s5 = ssub.s32 1, %s3
  %s6 = scalar_select 0, %s5, %s3
  $region1: #{tpu_custom_call.1} parent=0
    #allocation2 [shape = 'u8[8192]{0}', space=vmem, size = 0x2000, scoped, tag = 'input window, operand 0, single buffered']
    #allocation3 [shape = 's32[1]{0}', space=sflag, size = 0x4, scoped, tag = 'scoped memory for tpu_custom_call.1']
    #allocation4 [shape = 's32[1]{0}', space=sflag, size = 0x4, scoped, tag = 'scoped memory for tpu_custom_call.1']
    #allocation5 [shape = 'u8[8192]{0}', space=vmem, size = 0x2000, scoped, tag = 'input window, operand 1, single buffered']
    #allocation6 [shape = 's32[1]{0}', space=sflag, size = 0x4, scoped, tag = 'scoped memory for tpu_custom_call.1']
    #allocation7 [shape = 'u8[4096]{0}', space=vmem, size = 0x1000, scoped, tag = 'output window, operand 0, single buffered']
    %7 = vsyncpa [#allocation3], 0
    %8 = vsyncpa [#allocation6], 0
    %9 = vsyncpa [#allocation4], 0
    // Predicated region
    $region2: #{tpu_custom_call.1} parent=1 // pred_check
      _
    $region3: #{tpu_custom_call.1} parent=1 // pred_check_branch
      %11 = sbr.rel (0) target = $region5
    $region4: #{tpu_custom_call.1} parent=1 // pred_region
      %s12 = sadd.s32 0, 0
      %p13 = scmp.lt.s32.totalorder %s12, 0
      %s14 = scalar_select %p13, %s12, 0
      %s15 = smul.u32 2, %s14
      %17 = vsyncadd [#allocation3], 0
      %s18 = smul.addr %s15, 8
      %s19 = scalar_lea.hbm %s0, %s18
      %s20 = sshll.u32 %s19, 4
      %s21 = int_to_ptr.hbm [resolvable:$true] %s20
      %s22 = sshll.u32 [#allocation2], 4
      %s23 = int_to_ptr.vmem [resolvable:$true] %s22
      %28 = dma.hbm_to_vmem [thread:$0]  %s21, 256, %s23, [#allocation3], 128, 128, 8
    $region5: #{tpu_custom_call.1} parent=1 // pred_fallthru
      _
    // Predicated region
    $region6: #{tpu_custom_call.1} parent=1 // pred_check
      _
    $region7: #{tpu_custom_call.1} parent=1 // pred_check_branch
      %30 = sbr.rel (0) target = $region9
    $region8: #{tpu_custom_call.1} parent=1 // pred_region
      %s31 = sadd.s32 0, 0
      %p32 = scmp.lt.s32.totalorder %s31, 0
      %s33 = scalar_select %p32, %s31, 0
      %s34 = smul.u32 2, %s33
      %36 = vsyncadd [#allocation6], 0
      %s37 = smul.addr %s34, 8
      %s38 = scalar_lea.hbm %s1, %s37
      %s39 = sshll.u32 %s38, 4
      %s40 = int_to_ptr.hbm [resolvable:$true] %s39
      %s41 = sshll.u32 [#allocation5], 4
      %s42 = int_to_ptr.vmem [resolvable:$true] %s41
      %47 = dma.hbm_to_vmem [thread:$0]  %s40, 256, %s42, [#allocation6], 128, 128, 8
    $region9: #{tpu_custom_call.1} parent=1 // pred_fallthru
      _
    // Predicated region
    $region10: #{tpu_custom_call.1} parent=1 // pred_check
      _
    $region11: #{tpu_custom_call.1} parent=1 // pred_check_branch
      %49 = sbr.rel (0) target = $region13
    $region12: #{tpu_custom_call.1} parent=1 // pred_region
      %51 = dma.done [#allocation3], 256
    $region13: #{tpu_custom_call.1} parent=1 // pred_fallthru
      _
    // Predicated region
    $region14: #{tpu_custom_call.1} parent=1 // pred_check
      _
    $region15: #{tpu_custom_call.1} parent=1 // pred_check_branch
      %53 = sbr.rel (0) target = $region17
    $region16: #{tpu_custom_call.1} parent=1 // pred_region
      %55 = dma.done [#allocation6], 256
    $region17: #{tpu_custom_call.1} parent=1 // pred_fallthru
      _
    %s56 = sadd.s32 0, 0
    %p57 = scmp.lt.s32.totalorder %s56, 0
    %s58 = scalar_select %p57, %s56, 0
    %s59 = smul.u32 2, %s58
    %s60 = sadd.s32 0, 0
    %p61 = scmp.lt.s32.totalorder %s60, 0
    %s62 = scalar_select %p61, %s60, 0
    %s63 = smul.u32 2, %s62
    %p64 = scmp.eq.s32.totalorder 0, 0
    // Predicated region
    $region18: #{tpu_custom_call.1} parent=1 // pred_check
      %p65 = pneg %p64
    $region19: #{tpu_custom_call.1} parent=1 // pred_check_branch
      %67 = sbr.rel (%p65) target = $region21
    $region20: #{tpu_custom_call.1} parent=1 // pred_region
      %68 = vst [vmem:[#allocation7] sm:$0xff] 0.0
    $region21: #{tpu_custom_call.1} parent=1 // pred_fallthru
      _
    %v69 = vld [vmem:[#allocation2] sm:$0xff]
    %v70 = vld [vmem:[#allocation2 + $0x8] sm:$0xff]
    %v71 = vld [vmem:[#allocation5] sm:$0xff]
    %v72 = vld [vmem:[#allocation5 + $0x8] sm:$0xff]
    %v73 = vsub.f32 %v69, %v71
    %v74 = vsub.f32 %v70, %v72
    %v75 = vmul.f32 %v73, %v73
    %v76 = vmul.f32 %v74, %v74
    %v77 = vadd.f32 %v75, 1e-06
    %v78 = vadd.f32 %v76, 1e-06
    %v79 = vrsqrt.pop %v77
    %v80 = vmul.f32 %v79, %v77
    %v81 = vmul.f32 %v80, %v79
    %v82 = vmul.f32 0.5, %v81
    %v83 = vsub.f32 1.5, %v82
    %v84 = vmul.f32 %v79, %v83
    %v85 = vmul.f32 %v77, %v84
    %vm86 = vcmp.eq.f32.partialorder %v77, inf
    %v87 = vsel %vm86, %v77, %v85
    %vm88 = vcmp.eq.f32.partialorder %v77, 0.0
    %v89 = vand.u32 %v77, 2147483648
    %v90 = vsel %vm88, %v89, %v87
    %v91 = vrsqrt.pop %v78
    %v92 = vmul.f32 %v91, %v78
    %v93 = vmul.f32 %v92, %v91
    %v94 = vmul.f32 0.5, %v93
    %v95 = vsub.f32 1.5, %v94
    %v96 = vmul.f32 %v91, %v95
    %v97 = vmul.f32 %v78, %v96
    %vm98 = vcmp.eq.f32.partialorder %v78, inf
    %v99 = vsel %vm98, %v78, %v97
    %vm100 = vcmp.eq.f32.partialorder %v78, 0.0
    %v101 = vand.u32 %v78, 2147483648
    %v102 = vsel %vm100, %v101, %v99
    %v103 = vld [vmem:[#allocation7] sm:$0xff]
    %v104 = vadd.f32 %v90, %v102
    %v105 = vadd.f32 %v103, %v104
    %106 = vst [vmem:[#allocation7] sm:$0xff] %v105
    // Predicated region
    $region22: #{tpu_custom_call.1} parent=1 // pred_check
      _
    $region23: #{tpu_custom_call.1} parent=1 // pred_check_branch
      %108 = sbr.rel (0) target = $region25
    $region24: #{tpu_custom_call.1} parent=1 // pred_region
      %110 = vsyncadd [#allocation4], 0
      %s112 = sshll.u32 [#allocation7], 4
      %s113 = int_to_ptr.vmem [resolvable:$true] %s112
      %s114 = sshll.u32 %s2, 4
      %s115 = int_to_ptr.hbm [resolvable:$true] %s114
      %117 = dma.vmem_to_hbm [thread:$0]  %s113, 128, %s115, [#allocation4]
    $region25: #{tpu_custom_call.1} parent=1 // pred_fallthru
      _
    // Predicated region
    $region26: #{tpu_custom_call.1} parent=1 // pred_check
      _
    $region27: #{tpu_custom_call.1} parent=1 // pred_check_branch
      %119 = sbr.rel (0) target = $region29
    $region28: #{tpu_custom_call.1} parent=1 // pred_region
      %121 = dma.done [#allocation4], 128
    $region29: #{tpu_custom_call.1} parent=1 // pred_fallthru
      _
    %122 = vsyncpa [#allocation3], 1
    %123 = vsyncpa [#allocation6], 1
    %124 = vsyncpa [#allocation4], 1

</llo_original>
